<compile_context>
chip_gen: v7x
topology: tpu7x:2x2x1
jax: 0.10.0
libtpu: 0.0.40
codegen_flags: <defaults>
</compile_context>

<pallas_src>
import functools

import jax
import jax.numpy as jnp
import numpy as np
from jax.experimental import pallas as pl
from jax.experimental.pallas import tpu as pltpu

_MIB = 1024 * 1024


# --------------------------------------------------------------------------- helpers
def _round_up(x, m):
    return (x + m - 1) // m * m


def _pad_to(x, axis, target):
    pad = target - x.shape[axis]
    if pad == 0:
        return x
    widths = [(0, 0)] * x.ndim
    widths[axis] = (0, pad)
    return jnp.pad(x, widths)


def _clamp_vmem(nbytes):
    # 1.5x headroom for Mosaic internal scratch / spills; 32 MiB floor keeps tiny demo
    # shapes comfortable, 64 MiB ceiling is safe on every generation (v7x physical
    # VMEM is 64 MiB).  Pass vmem_limit_bytes explicitly for big-batch v5e/v6e runs.
    return int(min(max(int(nbytes * 1.5), 32 * _MIB), 64 * _MIB))


def _const_spec(shape, single_buffer):
    """Whole-array spec, constant index map (weight stays VMEM-resident across grid)."""
    index_map = lambda b: (0,) * len(shape)
    if single_buffer and hasattr(pl, "Buffered"):
        try:
            # Weights never change across grid steps -> no need to double-buffer them.
            return pl.BlockSpec(shape, index_map, pipeline_mode=pl.Buffered(1))
        except TypeError:  # older BlockSpec signature without pipeline_mode
            pass
    return pl.BlockSpec(shape, index_map)


# --------------------------------------------------------------------------- kernels
def _ctx_proj_kernel(att_ref, w_ref, b_ref, out_ref):
    """p_att = att_feats @ ctx2att_w + ctx2att_b for one (block_b, Lp, *) tile."""
    TB, Lp, A = att_ref.shape
    H = w_ref.shape[1]
    # Lp is a multiple of 8, so merging (TB, Lp) is a pure layout no-op.
    att = att_ref[...].astype(w_ref.dtype).reshape(TB * Lp, A)
    p = jnp.dot(att, w_ref[...], preferred_element_type=jnp.float32)
    p = p.reshape(TB, Lp, H) + b_ref[...].astype(jnp.float32)
    out_ref[...] = p.astype(out_ref.dtype)


def _step_kernel(xh_ref, patt_ref, att_ref, h_ref, c_ref,
                 h2a_w_ref, h2a_b_ref, aw_ref, w_xh_ref, w_ia_ref,
                 h_out_ref, c_out_ref, *, true_l, attn_dtype):
    TB, Lp, A = att_ref.shape
    H = h2a_w_ref.shape[1]
    R = h_ref.shape[1]
    w_dt = w_xh_ref.dtype

    h_prev = h_ref[...]                                   # (TB, R) f32
    c_prev = c_ref[...]                                   # (TB, R) f32

    # ---------------- attention ----------------
    att_h = (jnp.dot(h_prev.astype(w_dt), h2a_w_ref[...],
                     preferred_element_type=jnp.float32)
             + h2a_b_ref[...].astype(jnp.float32))        # (TB, H) f32

    # dot = tanh(p_att + att_h.unsqueeze(1)); attn_dtype = bf16 on v6e/v7x, f32 on v5e
    d = jnp.tanh(patt_ref[...].astype(attn_dtype)
                 + att_h[:, None, :].astype(attn_dtype))  # (TB, Lp, H)

    # alpha_net on the MXU: (TB*Lp, H) @ (H, 1).  Bias dropped: softmax shift-invariant.
    scores = jnp.dot(d.reshape(TB * Lp, H), aw_ref[...].astype(d.dtype),
                     preferred_element_type=jnp.float32).reshape(TB, Lp)

    # Mask zero-padded att positions so no attention mass leaks onto them.
    if true_l < Lp:
        pos = jax.lax.broadcasted_iota(jnp.int32, (TB, Lp), 1)
        scores = jnp.where(pos < true_l, scores, jnp.float32(-1e30))

    # softmax over att_size (f32); normalisation via the EUP approx reciprocal.
    scores = scores - jnp.max(scores, axis=-1, keepdims=True)
    e = jnp.exp(scores)
    weight = e * pl.reciprocal(jnp.sum(e, axis=-1, keepdims=True), approx=True)

    # att_res = bmm(weight.unsqueeze(1), att_feats).squeeze(1) -> MXU contraction over L.
    att = att_ref[...]
    att_res = jnp.einsum('bql,bla->bqa',
                         weight[:, None, :].astype(att.dtype), att,
                         preferred_element_type=jnp.float32).reshape(TB, A)

    # ---------------- LSTM cell (bias=False), gate order [i | f | g | o] -------------
    gates = (jnp.dot(xh_ref[...].astype(w_dt), w_xh_ref[...],
                     preferred_element_type=jnp.float32)
             + jnp.dot(att_res.astype(w_dt), w_ia_ref[...],
                       preferred_element_type=jnp.float32))   # (TB, 4R) f32

    i = jax.nn.sigmoid(gates[:, 0 * R:1 * R])
    f = jax.nn.sigmoid(gates[:, 1 * R:2 * R])
    g = jnp.tanh(gates[:, 2 * R:3 * R])
    o = jax.nn.sigmoid(gates[:, 3 * R:4 * R])

    c_new = f * c_prev + i * g
    h_new = o * jnp.tanh(c_new)

    h_out_ref[...] = h_new.astype(h_out_ref.dtype)
    c_out_ref[...] = c_new.astype(c_out_ref.dtype)


# --------------------------------------------------------------------------- wrappers
def prepare_kernel_params(params, weight_dtype=jnp.float32):
    """Kernel-ready weights: chosen dtype (bf16 supported), stacked gate weight."""
    wd = weight_dtype
    return {
        "ctx2att_w": params["ctx2att_w"].astype(wd),
        "ctx2att_b": params["ctx2att_b"].astype(jnp.float32),   # biases added in f32
        "h2att_w":   params["h2att_w"].astype(wd),
        "h2att_b":   params["h2att_b"].astype(jnp.float32),
        # Column vector so the alpha score is a plain MXU dot; bias dropped (softmax
        # is shift-invariant).
        "alpha_w":   params["alpha_w"].reshape(-1, 1).astype(wd),
        # [xt | h_{t-1}] hits one stacked weight -> fuses two of the gate matmuls.
        "w_xh":   jnp.concatenate([params["w_ih_x"], params["w_hh"]],
                                  axis=0).astype(wd),
        "w_ih_a": params["w_ih_a"].astype(wd),
    }


def precompute_ctx_projection(att_feats, ctx2att_w, ctx2att_b, *, block_b=16,
                              out_dtype=None, vmem_limit_bytes=None):
    """Timestep-invariant p_att = ctx2att(att_feats), computed once per image.

    Returns (B, Lp, H) with Lp = round_up(L, 8); padded rows hold only the bias and
    are masked before the softmax in the step kernel.
    """
    B, L, A = att_feats.shape
    H = ctx2att_w.shape[1]
    if out_dtype is None:
        out_dtype = ctx2att_w.dtype          # bf16 cache when weights are bf16
    Lp = _round_up(L, 8)
    block_b = max(8, _round_up(block_b, 8))
    Bp = _round_up(B, block_b)
    att_p = _pad_to(_pad_to(att_feats, 1, Lp), 0, Bp)

    if vmem_limit_bytes is None:
        stream = block_b * Lp * (A * att_feats.dtype.itemsize
                                 + H * np.dtype(out_dtype).itemsize)
        w_bytes = (ctx2att_w.size * ctx2att_w.dtype.itemsize
                   + ctx2att_b.size * ctx2att_b.dtype.itemsize)
        vmem_limit_bytes = _clamp_vmem(2 * stream + 2 * w_bytes)

    p_att = pl.pallas_call(
        _ctx_proj_kernel,
        grid=(Bp // block_b,),
        in_specs=[
            pl.BlockSpec((block_b, Lp, A), lambda b: (b, 0, 0)),
            pl.BlockSpec(ctx2att_w.shape, lambda b: (0, 0)),
            pl.BlockSpec(ctx2att_b.shape, lambda b: (0, 0)),
        ],
        out_specs=pl.BlockSpec((block_b, Lp, H), lambda b: (b, 0, 0)),
        out_shape=jax.ShapeDtypeStruct((Bp, Lp, H), out_dtype),
        compiler_params=pltpu.CompilerParams(
            dimension_semantics=("parallel",),
            vmem_limit_bytes=vmem_limit_bytes),
    )(att_p, ctx2att_w, ctx2att_b)
    return p_att[:B]


def show_attend_tell_core(xt, fc_feats, att_feats, state, kparams, *,
                          p_att=None, block_b=16, attn_compute_dtype=None,
                          single_buffer_weights=True, vmem_limit_bytes=None):
    """Mirrors ShowAttendTellCore.forward(xt, fc_feats, att_feats, state).

    `kparams` comes from prepare_kernel_params.  If the cached ctx2att projection
    `p_att` (B, L or Lp, att_hid) is supplied, the per-step ctx2att matmul is skipped.
    attn_compute_dtype controls the (TB, Lp, H) tanh stage dtype; it defaults to the
    weight dtype (pass jnp.float32 on v5e, which has no bf16 VPU/EUP path).
    """
    del fc_feats  # unused by the PyTorch forward as well
    B, L, A = att_feats.shape
    R = state[0].shape[-1]
    H = kparams["h2att_w"].shape[1]
    Lp = _round_up(L, 8)

    if attn_compute_dtype is None:
        attn_compute_dtype = kparams["w_xh"].dtype

    if p_att is None:
        p_att = precompute_ctx_projection(
            att_feats, kparams["ctx2att_w"], kparams["ctx2att_b"], block_b=block_b)
    if p_att.shape[1] != Lp:
        p_att = _pad_to(p_att, 1, Lp)
    att_feats = _pad_to(att_feats, 1, Lp)

    h_prev = state[0][-1].astype(jnp.float32)
    c_prev = state[1][-1].astype(jnp.float32)
    xh = jnp.concatenate([xt.astype(jnp.float32), h_prev], axis=1)   # (B, E+R)
    ER = xh.shape[1]

    block_b = max(8, _round_up(block_b, 8))
    Bp = _round_up(B, block_b)
    xh_p, patt_p, att_p, h_p, c_p = (
        _pad_to(x, 0, Bp) for x in (xh, p_att, att_feats, h_prev, c_prev))

    if vmem_limit_bytes is None:
        stream = (block_b * Lp * A * att_p.dtype.itemsize        # att_feats tile
                  + block_b * Lp * H * patt_p.dtype.itemsize     # p_att tile
                  + block_b * (ER + 4 * R) * 4)                  # xh + h/c in/out (f32)
        w_bytes = sum(kparams[k].size * kparams[k].dtype.itemsize
                      for k in ("h2att_w", "h2att_b", "alpha_w", "w_xh", "w_ih_a"))
        w_mult = 1 if single_buffer_weights else 2
        vmem_limit_bytes = _clamp_vmem(2 * stream + w_mult * w_bytes)

    in_specs = [
        pl.BlockSpec((block_b, ER), lambda b: (b, 0)),         # [xt | h_{t-1}]
        pl.BlockSpec((block_b, Lp, H), lambda b: (b, 0, 0)),   # cached ctx2att proj
        pl.BlockSpec((block_b, Lp, A), lambda b: (b, 0, 0)),   # att_feats
        pl.BlockSpec((block_b, R), lambda b: (b, 0)),          # h_{t-1} (aliased -> out 0)
        pl.BlockSpec((block_b, R), lambda b: (b, 0)),          # c_{t-1} (aliased -> out 1)
        _const_spec(kparams["h2att_w"].shape, single_buffer_weights),
        _const_spec(kparams["h2att_b"].shape, single_buffer_weights),
        _const_spec(kparams["alpha_w"].shape, single_buffer_weights),
        _const_spec(kparams["w_xh"].shape, single_buffer_weights),
        _const_spec(kparams["w_ih_a"].shape, single_buffer_weights),
    ]
    out_specs = [pl.BlockSpec((block_b, R), lambda b: (b, 0)),
                 pl.BlockSpec((block_b, R), lambda b: (b, 0))]
    out_shape = [jax.ShapeDtypeStruct((Bp, R), jnp.float32),
                 jax.ShapeDtypeStruct((Bp, R), jnp.float32)]

    kernel = functools.partial(_step_kernel, true_l=L, attn_dtype=attn_compute_dtype)
    h_new, c_new = pl.pallas_call(
        kernel,
        grid=(Bp // block_b,),
        in_specs=in_specs,
        out_specs=out_specs,
        out_shape=out_shape,
        input_output_aliases={3: 0, 4: 1},        # recycle h/c state buffers
        compiler_params=pltpu.CompilerParams(
            dimension_semantics=("parallel",),    # megacore sharding on v7x
            vmem_limit_bytes=vmem_limit_bytes),
    )(xh_p, patt_p, att_p, h_p, c_p,
      kparams["h2att_w"], kparams["h2att_b"], kparams["alpha_w"],
      kparams["w_xh"], kparams["w_ih_a"])

    h_new, c_new = h_new[:B], c_new[:B]
    # output.squeeze(0), (h, c) with PyTorch's (num_layers, B, R) state layout
    return h_new, (h_new[None, ...], c_new[None, ...])


# --------------------------------------------------------------------------- reference
def _reference(xt, att_feats, h_prev, c_prev, p):
    """Pure-JAX f32 reference mirroring the PyTorch forward (incl. alpha bias)."""
    B, L, A = att_feats.shape
    R = h_prev.shape[1]
    pa = att_feats.reshape(B * L, A) @ p["ctx2att_w"] + p["ctx2att_b"]
    ah = h_prev @ p["h2att_w"] + p["h2att_b"]
    d = jnp.tanh(pa.reshape(B, L, -1) + ah[:, None, :])
    scores = jnp.sum(d * p["alpha_w"][0][None, None, :], axis=-1) + p["alpha_b"][0, 0]
    w = jax.nn.softmax(scores, axis=-1)
    att_res = jnp.einsum("bl,bla->ba", w, att_feats)
    gates = xt @ p["w_ih_x"] + att_res @ p["w_ih_a"] + h_prev @ p["w_hh"]
    i = jax.nn.sigmoid(gates[:, :R])
    f = jax.nn.sigmoid(gates[:, R:2 * R])
    g = jnp.tanh(gates[:, 2 * R:3 * R])
    o = jax.nn.sigmoid(gates[:, 3 * R:])
    c = f * c_prev + i * g
    h = o * jnp.tanh(c)
    return h, h, c


if __name__ == "__main__":
    # Small, TPU-friendly stand-ins for the module's hyperparameters
    # (module defaults are E=512, A=2048, H=512, R=512, L~196; scaled down here).
    B, L = 32, 12          # L=12 is deliberately NOT a multiple of 8 -> exercises the
    #                        Lp padding + softmax mask path needed for L=196.
    E, A, H, R = 128, 256, 128, 128
    FC = 256               # fc_feat_size (unused by forward, kept for signature parity)
    BLOCK_B = 16           # batch tile -> grid=(2,); raise further per generation.
    # TODO(synk): nn.LSTM's dropout=0.5 only applies between layers (num_layers=1 here)
    # and is inert at inference; it is intentionally not modeled.

    key = jax.random.PRNGKey(0)
    ks = jax.random.split(key, 16)

    def init(k, shape, fan_in):
        bound = 1.0 / jnp.sqrt(jnp.float32(fan_in))
        return jax.random.uniform(k, shape, jnp.float32, -bound, bound)

    params = {
        "ctx2att_w": init(ks[0], (A, H), A),
        "ctx2att_b": init(ks[1], (1, H), A),
        "h2att_w":   init(ks[2], (R, H), R),
        "h2att_b":   init(ks[3], (1, H), R),
        "alpha_w":   init(ks[4], (1, H), H),
        "alpha_b":   init(ks[5], (1, 1), H),
        "w_ih_x":    init(ks[6], (E, 4 * R), E + A),
        "w_ih_a":    init(ks[7], (A, 4 * R), E + A),
        "w_hh":      init(ks[8], (R, 4 * R), R),
    }

    xt = jax.random.normal(ks[9], (B, E), jnp.float32)
    fc_feats = jax.random.normal(ks[10], (B, FC), jnp.float32)
    att_feats = jax.random.normal(ks[11], (B, L, A), jnp.float32)
    h0 = jax.random.normal(ks[12], (1, B, R), jnp.float32)
    c0 = jax.random.normal(ks[13], (1, B, R), jnp.float32)

    ref_out, ref_h, ref_c = _reference(xt, att_feats, h0[-1], c0[-1], params)

    def run_step(kp, att, p_att, attn_dtype):
        try:
            return show_attend_tell_core(
                xt, fc_feats, att, (h0, c0), kp, p_att=p_att, block_b=BLOCK_B,
                attn_compute_dtype=attn_dtype, single_buffer_weights=True)
        except Exception:
            # pl.Buffered(1) single-buffered resident weights not supported on this
            # jax/Mosaic combination -> retry with default double buffering.
            return show_attend_tell_core(
                xt, fc_feats, att, (h0, c0), kp, p_att=p_att, block_b=BLOCK_B,
                attn_compute_dtype=attn_dtype, single_buffer_weights=False)

    # ---- run 1: f32 weights, f32 attention compute ---------------------------------
    kp32 = prepare_kernel_params(params, jnp.float32)
    p_att32 = precompute_ctx_projection(att_feats, kp32["ctx2att_w"],
                                        kp32["ctx2att_b"], block_b=BLOCK_B)
    out32, (h32, c32) = run_step(kp32, att_feats, p_att32, jnp.float32)
    jax.block_until_ready((out32, h32, c32))
    # 1e-2 covers the EUP approx-reciprocal softmax and MXU f32 matmul pass rounding.
    assert jnp.allclose(out32, ref_out, atol=1e-2, rtol=1e-2)
    assert jnp.allclose(h32[0], ref_h, atol=1e-2, rtol=1e-2)
    assert jnp.allclose(c32[0], ref_c, atol=1e-2, rtol=1e-2)

    # ---- run 2: bf16 weights, bf16 att_feats / p_att stream, bf16 attention compute -
    kp16 = prepare_kernel_params(params, jnp.bfloat16)
    att16 = att_feats.astype(jnp.bfloat16)
    p_att16 = precompute_ctx_projection(att16, kp16["ctx2att_w"],
                                        kp16["ctx2att_b"], block_b=BLOCK_B)  # bf16 cache
    out16, (h16, c16) = run_step(kp16, att16, p_att16, jnp.bfloat16)
    jax.block_until_ready((out16, h16, c16))
    assert jnp.allclose(out16, ref_out, atol=5e-2, rtol=5e-2)
    assert jnp.allclose(c16[0], ref_c, atol=5e-2, rtol=5e-2)

    print("KERNEL_OK")
</pallas_src>

<mosaic_0001>
module attributes {stable_mosaic.version = 11 : i64} {
  func.func @_ctx_proj_kernel(%arg0: i32, %arg1: memref<16x16x256xf32, #tpu.memory_space<vmem>>, %arg2: memref<256x128xf32, #tpu.memory_space<vmem>>, %arg3: memref<1x128xf32, #tpu.memory_space<vmem>>, %arg4: memref<16x16x128xf32, #tpu.memory_space<vmem>>) attributes {dimension_semantics = [#tpu.dimension_semantics<parallel>], iteration_bounds = array<i64: 2>, scalar_prefetch = 0 : i64, scratch_operands = 0 : i64, tpu.core_type = #tpu.core_type<tc>, window_params = [{transform_indices = @transform_0, window_bounds = array<i64: 16, 16, 256>}, {pipeline_mode = #tpu.pipeline_mode<synchronous>, transform_indices = @transform_1, window_bounds = array<i64: 256, 128>}, {pipeline_mode = #tpu.pipeline_mode<synchronous>, transform_indices = @transform_2, window_bounds = array<i64: 1, 128>}, {transform_indices = @transform_3, window_bounds = array<i64: 16, 16, 128>}]} {
    %c0 = arith.constant 0 : index
    %c0_0 = arith.constant 0 : index
    %c0_1 = arith.constant 0 : index
    %0 = vector.load %arg1[%c0, %c0_0, %c0_1] : memref<16x16x256xf32, #tpu.memory_space<vmem>>, vector<16x16x256xf32>
    %1 = vector.shape_cast %0 : vector<16x16x256xf32> to vector<256x256xf32>
    %c0_2 = arith.constant 0 : index
    %c0_3 = arith.constant 0 : index
    %2 = vector.load %arg2[%c0_2, %c0_3] : memref<256x128xf32, #tpu.memory_space<vmem>>, vector<256x128xf32>
    %cst = arith.constant dense<0.000000e+00> : vector<256x128xf32>
    %3 = tpu.matmul %1, %2, %cst {dimension_numbers = #tpu.dot_dimension_numbers<[1], [0], [0], [1], [0, 0, 1, 1], [], []>} : vector<256x256xf32>, vector<256x128xf32>, vector<256x128xf32> -> vector<256x128xf32>
    %4 = vector.shape_cast %3 : vector<256x128xf32> to vector<16x16x128xf32>
    %c0_4 = arith.constant 0 : index
    %c0_5 = arith.constant 0 : index
    %5 = vector.load %arg3[%c0_4, %c0_5] : memref<1x128xf32, #tpu.memory_space<vmem>>, vector<1x128xf32>
    %6 = vector.shape_cast %5 : vector<1x128xf32> to vector<1x1x128xf32>
    %7 = vector.broadcast %6 : vector<1x1x128xf32> to vector<16x16x128xf32>
    %8 = arith.addf %4, %7 : vector<16x16x128xf32>
    %c0_6 = arith.constant 0 : index
    %c0_7 = arith.constant 0 : index
    %c0_8 = arith.constant 0 : index
    %9 = vector.load %arg4[%c0_6, %c0_7, %c0_8] : memref<16x16x128xf32, #tpu.memory_space<vmem>>, vector<16x16x128xf32>
    tpu.vector_store %arg4[%c0_6, %c0_7, %c0_8], %8 {strides = array<i32>} : memref<16x16x128xf32, #tpu.memory_space<vmem>>, vector<16x16x128xf32>,
    return
  }
  func.func @transform_0(%arg0: i32) -> (i32, i32, i32) {
    %c0_i32 = arith.constant 0 : i32
    %c0_i32_0 = arith.constant 0 : i32
    %c0_i32_1 = arith.constant 0 : i32
    return %arg0, %c0_i32, %c0_i32_0 : i32, i32, i32
  }
  func.func @transform_1(%arg0: i32) -> (i32, i32) {
    %c0_i32 = arith.constant 0 : i32
    %c0_i32_0 = arith.constant 0 : i32
    %c0_i32_1 = arith.constant 0 : i32
    return %c0_i32, %c0_i32_0 : i32, i32
  }
  func.func @transform_2(%arg0: i32) -> (i32, i32) {
    %c0_i32 = arith.constant 0 : i32
    %c0_i32_0 = arith.constant 0 : i32
    %c0_i32_1 = arith.constant 0 : i32
    return %c0_i32, %c0_i32_0 : i32, i32
  }
  func.func @transform_3(%arg0: i32) -> (i32, i32, i32) {
    %c0_i32 = arith.constant 0 : i32
    %c0_i32_0 = arith.constant 0 : i32
    %c0_i32_1 = arith.constant 0 : i32
    return %arg0, %c0_i32, %c0_i32_0 : i32, i32, i32
  }
}

</mosaic_0001>

<llo_original>
// kernel: tpu_custom_call.1
$region0: #{tpu_custom_call.1}
  #allocation0 [shape = 'u32[]', space=smem, size = 0x4, offset = 0x4, fixed_abs, tag = 'smem constant byte address 0x4 - core index']
  #allocation1 [shape = 'u32[144,128]{1,0:T(1,128)}', space=vmem, size = 0x12000, scoped, tag = 'internal scratch']
  %s0 = inlined_call_operand.hbm [shape: f32[32,16,256], index: 0, kind: input, shape index: {}]
  %s1 = inlined_call_operand.hbm [shape: f32[256,128], index: 1, kind: input, shape index: {}]
  %s2 = inlined_call_operand.vmem [shape: f32[1,128], index: 2, kind: input, shape index: {}]
  %s3 = inlined_call_operand.hbm [shape: f32[32,16,128], index: 3, kind: output, shape index: {}]
  %s4 = sld [smem:[#allocation0]]
  $region53: #{tpu_custom_call.1} parent=0
    _
  %s6 = ssub.s32 1, %s4
  %s7 = scalar_select 0, %s6, %s4
  $region1: #{tpu_custom_call.1} parent=0
    #allocation2 [shape = 'u8[524288]{0}', space=vmem, size = 0x80000, scoped, tag = 'input window, operand 0']
    #allocation3 [shape = 's32[2]{0}', space=sflag, size = 0x8, scoped, tag = 'scoped memory for tpu_custom_call.1']
    #allocation4 [shape = 's32[2]{0}', space=sflag, size = 0x8, scoped, tag = 'scoped memory for tpu_custom_call.1']
    #allocation5 [shape = 'u8[131072]{0}', space=vmem, size = 0x20000, scoped, tag = 'input window, operand 1, single buffered']
    #allocation6 [shape = 's32[1]{0}', space=sflag, size = 0x4, scoped, tag = 'scoped memory for tpu_custom_call.1']
    #allocation7 [shape = 'u8[262144]{0}', space=vmem, size = 0x40000, scoped, tag = 'output window, operand 0']
    %8 = vsyncpa [#allocation3], 0
    %s9 = scalar_lea.sflag [#allocation3], 1
    %10 = vsyncpa %s9, 0
    %11 = vsyncpa [#allocation6], 0
    %12 = vsyncpa [#allocation4], 0
    %s13 = scalar_lea.sflag [#allocation4], 1
    %14 = vsyncpa %s13, 0
    loop: start=0, step=1, limit=4
    $region2: #{tpu_custom_call.1} parent=1 // loop_pre_header
      _
    $region3: #{tpu_custom_call.1} parent=1 // loop_header
      %s16 = sphi 0, %s20
      %p17 = scmp.ge.s32.totalorder %s16, 4
      %s26 = sphi 0, %s28
      %s29 = sphi 0, %s26
      %s30 = sphi 0, %s29
      %s46 = sphi 0, %s30
      %s50 = sphi 0, %s50
      %s52 = sphi 0, %s50
      %s53 = sphi 0, %s52
      %s67 = sphi 0, %s53
      %s71 = sphi 0, %s71
      %s73 = sphi 0, %s71
      %s74 = sphi 0, %s73
      %s88 = sphi 0, %s74
      %s94 = sphi 0, %s96
      %s97 = sphi 0, %s94
      %s98 = sphi 0, %s97
      %s114 = sphi 0, %s98
    $region4: #{tpu_custom_call.1} parent=1 // loop_header_branch
      %19 = sbr.rel (%p17) target = $region8
    $region5: #{tpu_custom_call.1} parent=1 // loop_body
      %s21 = ssub.s32 %s16, 1
      %s22 = ssub.s32 %s16, 2
      %s23 = sadd.s32 %s16, 1
      %s24 = ssub.s32 %s16, %s23
      %p25 = scmp.eq.s32.totalorder %s24, 0
      %s27 = sadd.s32 %s26, 1
      %s28 = scalar_select %p25, %s26, %s27
      %p31 = pneg %p25
      %p32 = scmp.eq.s32.totalorder %s16, 1
      %p33 = por %p31, %p32
      %p34 = scmp.ne.s32.totalorder %s26, %s29
      %p35 = scmp.eq.s32.totalorder %s16, 0
      %p36 = por %p34, %p35
      %p37 = scmp.ne.s32.totalorder %s26, %s29
      %p38 = scmp.eq.s32.totalorder %s21, 1
      %p39 = por %p37, %p38
      %p40 = scmp.ne.s32.totalorder %s29, %s30
      %p41 = scmp.eq.s32.totalorder %s21, 0
      %p42 = por %p40, %p41
      %p43 = scmp.ne.s32.totalorder %s29, %s30
      %p44 = scmp.eq.s32.totalorder %s22, 1
      %p45 = por %p43, %p44
      %p47 = scmp.ne.s32.totalorder %s30, %s46
      %p48 = scmp.eq.s32.totalorder %s22, 0
      %p49 = por %p47, %p48
      %s51 = sadd.s32 %s50, 1
      %p54 = scmp.eq.s32.totalorder %s16, 1
      %p55 = scmp.ne.s32.totalorder %s50, %s52
      %p56 = scmp.eq.s32.totalorder %s16, 0
      %p57 = por %p55, %p56
      %p58 = scmp.ne.s32.totalorder %s50, %s52
      %p59 = scmp.eq.s32.totalorder %s21, 1
      %p60 = por %p58, %p59
      %p61 = scmp.ne.s32.totalorder %s52, %s53
      %p62 = scmp.eq.s32.totalorder %s21, 0
      %p63 = por %p61, %p62
      %p64 = scmp.ne.s32.totalorder %s52, %s53
      %p65 = scmp.eq.s32.totalorder %s22, 1
      %p66 = por %p64, %p65
      %p68 = scmp.ne.s32.totalorder %s53, %s67
      %p69 = scmp.eq.s32.totalorder %s22, 0
      %p70 = por %p68, %p69
      %s72 = sadd.s32 %s71, 1
      %p75 = scmp.eq.s32.totalorder %s16, 1
      %p76 = scmp.ne.s32.totalorder %s71, %s73
      %p77 = scmp.eq.s32.totalorder %s16, 0
      %p78 = por %p76, %p77
      %p79 = scmp.ne.s32.totalorder %s71, %s73
      %p80 = scmp.eq.s32.totalorder %s21, 1
      %p81 = por %p79, %p80
      %p82 = scmp.ne.s32.totalorder %s73, %s74
      %p83 = scmp.eq.s32.totalorder %s21, 0
      %p84 = por %p82, %p83
      %p85 = scmp.ne.s32.totalorder %s73, %s74
      %p86 = scmp.eq.s32.totalorder %s22, 1
      %p87 = por %p85, %p86
      %p89 = scmp.ne.s32.totalorder %s74, %s88
      %p90 = scmp.eq.s32.totalorder %s22, 0
      %p91 = por %p89, %p90
      %s92 = ssub.s32 %s16, %s23
      %p93 = scmp.eq.s32.totalorder %s92, 0
      %s95 = sadd.s32 %s94, 1
      %s96 = scalar_select %p93, %s94, %s95
      %p99 = pneg %p93
      %p100 = scmp.eq.s32.totalorder %s16, 1
      %p101 = por %p99, %p100
      %p102 = scmp.ne.s32.totalorder %s94, %s97
      %p103 = scmp.eq.s32.totalorder %s16, 0
      %p104 = por %p102, %p103
      %p105 = scmp.ne.s32.totalorder %s94, %s97
      %p106 = scmp.eq.s32.totalorder %s21, 1
      %p107 = por %p105, %p106
      %p108 = scmp.ne.s32.totalorder %s97, %s98
      %p109 = scmp.eq.s32.totalorder %s21, 0
      %p110 = por %p108, %p109
      %p111 = scmp.ne.s32.totalorder %s97, %s98
      %p112 = scmp.eq.s32.totalorder %s22, 1
      %p113 = por %p111, %p112
      %p115 = scmp.ne.s32.totalorder %s98, %s114
      %p116 = scmp.eq.s32.totalorder %s22, 0
      %p117 = por %p115, %p116
      %p118 = scmp.le.s32.totalorder 1, %s16
      %p119 = scmp.lt.s32.totalorder %s16, 3
      %p120 = pnand %p118, %p119
      %p121 = pneg %p120
      // Predicated region
      $region9: #{tpu_custom_call.1} parent=5 // pred_check
        _
      $region10: #{tpu_custom_call.1} parent=5 // pred_check_branch
        %123 = sbr.rel (%p120) target = $region12
      $region11: #{tpu_custom_call.1} parent=5 // pred_region
        %s124 = ssub.s32 %s16, 1
        // Predicated region
        $region13: #{tpu_custom_call.1} parent=11 // pred_check
          %p125 = pneg %p63
        $region14: #{tpu_custom_call.1} parent=11 // pred_check_branch
          %127 = sbr.rel (%p125) target = $region16
        $region15: #{tpu_custom_call.1} parent=11 // pred_region
          %s129 = ssub.s32 4096, 4096
          %130 = vsyncadd [#allocation6], %s129
          %s131 = sshll.u32 [#allocation5], 4
          %s132 = int_to_ptr.vmem [resolvable:$true] %s131
          %137 = dma.hbm_to_vmem [thread:$0]  %s1, 4096, %s132, [#allocation6], 128, 128, 8
        $region16: #{tpu_custom_call.1} parent=11 // pred_fallthru
          _
        // Predicated region
        $region17: #{tpu_custom_call.1} parent=11 // pred_check
          %p138 = pneg %p84
        $region18: #{tpu_custom_call.1} parent=11 // pred_check_branch
          %140 = sbr.rel (%p138) target = $region20
        $region19: #{tpu_custom_call.1} parent=11 // pred_region
          _
        $region20: #{tpu_custom_call.1} parent=11 // pred_fallthru
          _
      $region12: #{tpu_custom_call.1} parent=5 // pred_fallthru
        _
      %p141 = scmp.lt.s32.totalorder %s16, 2
      // Predicated region
      $region21: #{tpu_custom_call.1} parent=5 // pred_check
        %p142 = pneg %p141
      $region22: #{tpu_custom_call.1} parent=5 // pred_check_branch
        %144 = sbr.rel (%p142) target = $region24
      $region23: #{tpu_custom_call.1} parent=5 // pred_region
        // Predicated region
        $region25: #{tpu_custom_call.1} parent=23 // pred_check
          %p145 = pneg %p36
        $region26: #{tpu_custom_call.1} parent=23 // pred_check_branch
          %147 = sbr.rel (%p145) target = $region28
        $region27: #{tpu_custom_call.1} parent=23 // pred_region
          %s148 = sand.u32 %s26, 1
          %s149 = scalar_lea.sflag [#allocation3], %s148
          %s150 = sand.u32 %s26, 1
          %s151 = smul.addr %s150, 512
          %s152 = scalar_lea.vmem [#allocation2], %s151
          %s153 = smul.u32 16, %s16
          %s155 = ssub.s32 8192, 8192
          %156 = vsyncadd %s149, %s155
          %s157 = smul.addr %s153, 4
          %s158 = smul.addr %s157, 128
          %s159 = scalar_lea.hbm %s0, %s158
          %s160 = sshll.u32 %s152, 4
          %s161 = int_to_ptr.vmem [resolvable:$true] %s160
          %166 = dma.hbm_to_vmem [thread:$0]  %s159, 8192, %s161, %s149, 256, 256, 16
        $region28: #{tpu_custom_call.1} parent=23 // pred_fallthru
          _
      $region24: #{tpu_custom_call.1} parent=5 // pred_fallthru
        _
      %p167 = scmp.le.s32.totalorder 1, %s16
      %p168 = scmp.lt.s32.totalorder %s16, 3
      %p169 = pnand %p167, %p168
      %p170 = pneg %p169
      // Predicated region
      $region29: #{tpu_custom_call.1} parent=5 // pred_check
        _
      $region30: #{tpu_custom_call.1} parent=5 // pred_check_branch
        %172 = sbr.rel (%p169) target = $region32
      $region31: #{tpu_custom_call.1} parent=5 // pred_region
        %s173 = ssub.s32 %s16, 1
        %s174 = sand.u32 %s29, 1
        %s175 = scalar_lea.sflag [#allocation3], %s174
        %s176 = sand.u32 %s29, 1
        %s177 = smul.addr %s176, 512
        %s178 = scalar_lea.vmem [#allocation2], %s177
        // Predicated region
        $region33: #{tpu_custom_call.1} parent=31 // pred_check
          %p179 = pneg %p42
        $region34: #{tpu_custom_call.1} parent=31 // pred_check_branch
          %181 = sbr.rel (%p179) target = $region36
        $region35: #{tpu_custom_call.1} parent=31 // pred_region
          %182 = dma.done %s175, 8192
        $region36: #{tpu_custom_call.1} parent=31 // pred_fallthru
          _
        // Predicated region
        $region37: #{tpu_custom_call.1} parent=31 // pred_check
          %p183 = pneg %p63
        $region38: #{tpu_custom_call.1} parent=31 // pred_check_branch
          %185 = sbr.rel (%p183) target = $region40
        $region39: #{tpu_custom_call.1} parent=31 // pred_region
          %186 = dma.done [#allocation6], 4096
        $region40: #{tpu_custom_call.1} parent=31 // pred_fallthru
          _
        %s187 = sand.u32 %s29, 1
        %s188 = scalar_lea.sflag [#allocation3], %s187
        %s189 = sand.u32 %s29, 1
        %s190 = smul.addr %s189, 512
        %s191 = scalar_lea.vmem [#allocation2], %s190
        %p192 = pneg %p42
        %p193 = pneg %p39
        %p194 = pneg %p63
        %p195 = pneg %p60
        %p196 = pneg %p84
        %p197 = pneg %p81
        %p198 = pneg %p110
        %p199 = pneg %p107
        %s200 = sand.u32 %s97, 1
        %s201 = scalar_lea.sflag [#allocation4], %s200
        %s202 = sand.u32 %s97, 1
        %s203 = smul.addr %s202, 256
        %s204 = scalar_lea.vmem [#allocation7], %s203
        %s205 = smul.u32 16, %s21
        %s206 = smul.u32 16, %s21
        %v207 = vld [vmem:[%s178] sm:$0xff]
        %v208 = vld [vmem:[%s178 + $0x8] sm:$0xff]
        %v209 = vld [vmem:[%s178 + $0x10] sm:$0xff]
        %v210 = vld [vmem:[%s178 + $0x18] sm:$0xff]
        %v211 = vld [vmem:[%s178 + $0x20] sm:$0xff]
        %v212 = vld [vmem:[%s178 + $0x28] sm:$0xff]
        %v213 = vld [vmem:[%s178 + $0x30] sm:$0xff]
        %v214 = vld [vmem:[%s178 + $0x38] sm:$0xff]
        %v215 = vld [vmem:[%s178 + $0x40] sm:$0xff]
        %v216 = vld [vmem:[%s178 + $0x48] sm:$0xff]
        %v217 = vld [vmem:[%s178 + $0x50] sm:$0xff]
        %v218 = vld [vmem:[%s178 + $0x58] sm:$0xff]
        %v219 = vld [vmem:[%s178 + $0x60] sm:$0xff]
        %v220 = vld [vmem:[%s178 + $0x68] sm:$0xff]
        %v221 = vld [vmem:[%s178 + $0x70] sm:$0xff]
        %v222 = vld [vmem:[%s178 + $0x78] sm:$0xff]
        %v223 = vld [vmem:[%s178 + $0x80] sm:$0xff]
        %v224 = vld [vmem:[%s178 + $0x88] sm:$0xff]
        %v225 = vld [vmem:[%s178 + $0x90] sm:$0xff]
        %v226 = vld [vmem:[%s178 + $0x98] sm:$0xff]
        %v227 = vld [vmem:[%s178 + $0xa0] sm:$0xff]
        %v228 = vld [vmem:[%s178 + $0xa8] sm:$0xff]
        %v229 = vld [vmem:[%s178 + $0xb0] sm:$0xff]
        %v230 = vld [vmem:[%s178 + $0xb8] sm:$0xff]
        %v231 = vld [vmem:[%s178 + $0xc0] sm:$0xff]
        %v232 = vld [vmem:[%s178 + $0xc8] sm:$0xff]
        %v233 = vld [vmem:[%s178 + $0xd0] sm:$0xff]
        %v234 = vld [vmem:[%s178 + $0xd8] sm:$0xff]
        %v235 = vld [vmem:[%s178 + $0xe0] sm:$0xff]
        %v236 = vld [vmem:[%s178 + $0xe8] sm:$0xff]
        %v237 = vld [vmem:[%s178 + $0xf0] sm:$0xff]
        %v238 = vld [vmem:[%s178 + $0xf8] sm:$0xff]
        %v239 = vld [vmem:[%s178 + $0x100] sm:$0xff]
        %v240 = vld [vmem:[%s178 + $0x108] sm:$0xff]
        %v241 = vld [vmem:[%s178 + $0x110] sm:$0xff]
        %v242 = vld [vmem:[%s178 + $0x118] sm:$0xff]
        %v243 = vld [vmem:[%s178 + $0x120] sm:$0xff]
        %v244 = vld [vmem:[%s178 + $0x128] sm:$0xff]
        %v245 = vld [vmem:[%s178 + $0x130] sm:$0xff]
        %v246 = vld [vmem:[%s178 + $0x138] sm:$0xff]
        %v247 = vld [vmem:[%s178 + $0x140] sm:$0xff]
        %v248 = vld [vmem:[%s178 + $0x148] sm:$0xff]
        %v249 = vld [vmem:[%s178 + $0x150] sm:$0xff]
        %v250 = vld [vmem:[%s178 + $0x158] sm:$0xff]
        %v251 = vld [vmem:[%s178 + $0x160] sm:$0xff]
        %v252 = vld [vmem:[%s178 + $0x168] sm:$0xff]
        %v253 = vld [vmem:[%s178 + $0x170] sm:$0xff]
        %v254 = vld [vmem:[%s178 + $0x178] sm:$0xff]
        %v255 = vld [vmem:[%s178 + $0x180] sm:$0xff]
        %v256 = vld [vmem:[%s178 + $0x188] sm:$0xff]
        %v257 = vld [vmem:[%s178 + $0x190] sm:$0xff]
        %v258 = vld [vmem:[%s178 + $0x198] sm:$0xff]
        %v259 = vld [vmem:[%s178 + $0x1a0] sm:$0xff]
        %v260 = vld [vmem:[%s178 + $0x1a8] sm:$0xff]
        %v261 = vld [vmem:[%s178 + $0x1b0] sm:$0xff]
        %v262 = vld [vmem:[%s178 + $0x1b8] sm:$0xff]
        %v263 = vld [vmem:[%s178 + $0x1c0] sm:$0xff]
        %v264 = vld [vmem:[%s178 + $0x1c8] sm:$0xff]
        %v265 = vld [vmem:[%s178 + $0x1d0] sm:$0xff]
        %v266 = vld [vmem:[%s178 + $0x1d8] sm:$0xff]
        %v267 = vld [vmem:[%s178 + $0x1e0] sm:$0xff]
        %v268 = vld [vmem:[%s178 + $0x1e8] sm:$0xff]
        %v269 = vld [vmem:[%s178 + $0x1f0] sm:$0xff]
        %v270 = vld [vmem:[%s178 + $0x1f8] sm:$0xff]
        %v271 = vld [vmem:[#allocation5] sm:$0xff]
        %v272 = vld [vmem:[#allocation5 + $0x8] sm:$0xff]
        %v273 = vld [vmem:[#allocation5 + $0x10] sm:$0xff]
        %v274 = vld [vmem:[#allocation5 + $0x18] sm:$0xff]
        %v275 = vld [vmem:[#allocation5 + $0x20] sm:$0xff]
        %v276 = vld [vmem:[#allocation5 + $0x28] sm:$0xff]
        %v277 = vld [vmem:[#allocation5 + $0x30] sm:$0xff]
        %v278 = vld [vmem:[#allocation5 + $0x38] sm:$0xff]
        %v279 = vld [vmem:[#allocation5 + $0x40] sm:$0xff]
        %v280 = vld [vmem:[#allocation5 + $0x48] sm:$0xff]
        %v281 = vld [vmem:[#allocation5 + $0x50] sm:$0xff]
        %v282 = vld [vmem:[#allocation5 + $0x58] sm:$0xff]
        %v283 = vld [vmem:[#allocation5 + $0x60] sm:$0xff]
        %v284 = vld [vmem:[#allocation5 + $0x68] sm:$0xff]
        %v285 = vld [vmem:[#allocation5 + $0x70] sm:$0xff]
        %v286 = vld [vmem:[#allocation5 + $0x78] sm:$0xff]
        %v287 = vld [vmem:[#allocation5 + $0x80] sm:$0xff]
        %v288 = vld [vmem:[#allocation5 + $0x88] sm:$0xff]
        %v289 = vld [vmem:[#allocation5 + $0x90] sm:$0xff]
        %v290 = vld [vmem:[#allocation5 + $0x98] sm:$0xff]
        %v291 = vld [vmem:[#allocation5 + $0xa0] sm:$0xff]
        %v292 = vld [vmem:[#allocation5 + $0xa8] sm:$0xff]
        %v293 = vld [vmem:[#allocation5 + $0xb0] sm:$0xff]
        %v294 = vld [vmem:[#allocation5 + $0xb8] sm:$0xff]
        %v295 = vld [vmem:[#allocation5 + $0xc0] sm:$0xff]
        %v296 = vld [vmem:[#allocation5 + $0xc8] sm:$0xff]
        %v297 = vld [vmem:[#allocation5 + $0xd0] sm:$0xff]
        %v298 = vld [vmem:[#allocation5 + $0xd8] sm:$0xff]
        %v299 = vld [vmem:[#allocation5 + $0xe0] sm:$0xff]
        %v300 = vld [vmem:[#allocation5 + $0xe8] sm:$0xff]
        %v301 = vld [vmem:[#allocation5 + $0xf0] sm:$0xff]
        %v302 = vld [vmem:[#allocation5 + $0xf8] sm:$0xff]
        %303 = vmatprep.subr.mxu0 0.0
        %304 = vmatpush1.msra.mxu0 %v271
        %305 = vmatprep.subr.mxu0 0.0
        %306 = vmatpush1.msra.mxu0 %v272
        %307 = vmatprep.subr.mxu0 0.0
        %308 = vmatpush1.msra.mxu0 %v273
        %309 = vmatprep.subr.mxu0 0.0
        %310 = vmatpush1.msra.mxu0 %v274
        %311 = vmatprep.subr.mxu0 0.0
        %312 = vmatpush1.msra.mxu0 %v275
        %313 = vmatprep.subr.mxu0 0.0
        %314 = vmatpush1.msra.mxu0 %v276
        %315 = vmatprep.subr.mxu0 0.0
        %316 = vmatpush1.msra.mxu0 %v277
        %317 = vmatprep.subr.mxu0 0.0
        %318 = vmatpush1.msra.mxu0 %v278
        %319 = vmatprep.subr.mxu0 0.0
        %320 = vmatpush1.msra.mxu0 %v279
        %321 = vmatprep.subr.mxu0 0.0
        %322 = vmatpush1.msra.mxu0 %v280
        %323 = vmatprep.subr.mxu0 0.0
        %324 = vmatpush1.msra.mxu0 %v281
        %325 = vmatprep.subr.mxu0 0.0
        %326 = vmatpush1.msra.mxu0 %v282
        %327 = vmatprep.subr.mxu0 0.0
        %328 = vmatpush1.msra.mxu0 %v283
        %329 = vmatprep.subr.mxu0 0.0
        %330 = vmatpush1.msra.mxu0 %v284
        %331 = vmatprep.subr.mxu0 0.0
        %332 = vmatpush1.msra.mxu0 %v285
        %333 = vmatprep.subr.mxu0 0.0
        %334 = vmatpush1.msra.mxu0 %v286
        %335 = vmatprep.subr.mxu0 0.0
        %336 = vmatpush1.msra.mxu0 %v287
        %337 = vmatprep.subr.mxu0 0.0
        %338 = vmatpush1.msra.mxu0 %v288
        %339 = vmatprep.subr.mxu0 0.0
        %340 = vmatpush1.msra.mxu0 %v289
        %341 = vmatprep.subr.mxu0 0.0
        %342 = vmatpush1.msra.mxu0 %v290
        %343 = vmatprep.subr.mxu0 0.0
        %344 = vmatpush1.msra.mxu0 %v291
        %345 = vmatprep.subr.mxu0 0.0
        %346 = vmatpush1.msra.mxu0 %v292
        %347 = vmatprep.subr.mxu0 0.0
        %348 = vmatpush1.msra.mxu0 %v293
        %349 = vmatprep.subr.mxu0 0.0
        %350 = vmatpush1.msra.mxu0 %v294
        %351 = vmatprep.subr.mxu0 0.0
        %352 = vmatpush1.msra.mxu0 %v295
        %353 = vmatprep.subr.mxu0 0.0
        %354 = vmatpush1.msra.mxu0 %v296
        %355 = vmatprep.subr.mxu0 0.0
        %356 = vmatpush1.msra.mxu0 %v297
        %357 = vmatprep.subr.mxu0 0.0
        %358 = vmatpush1.msra.mxu0 %v298
        %359 = vmatprep.subr.mxu0 0.0
        %360 = vmatpush1.msra.mxu0 %v299
        %361 = vmatprep.subr.mxu0 0.0
        %362 = vmatpush1.msra.mxu0 %v300
        %363 = vmatprep.subr.mxu0 0.0
        %364 = vmatpush1.msra.mxu0 %v301
        %365 = vmatprep.subr.mxu0 0.0
        %366 = vmatpush1.msra.mxu0 %v302
        %367 = vmatprep.mubr.f32.mxu0 %v208
        %368 = vmatmul.mubr.f32.gmra.mrb[0].mxu0 %v207
        %v369 = vpop.f32.mrb[0].mxu0
        %v370 = vadd.f32 0.0, %v369
        %v371 = vpop.f32.mrb[0].mxu0
        %372 = vmatprep.mubr.f32.mxu0 %v210
        %373 = vmatmul.mubr.f32.gmra.mrb[0].mxu0 %v209
        %v374 = vpop.f32.mrb[0].mxu0
        %v375 = vadd.f32 0.0, %v374
        %v376 = vpop.f32.mrb[0].mxu0
        %377 = vmatprep.mubr.f32.mxu0 %v212
        %378 = vmatmul.mubr.f32.gmra.mrb[0].mxu0 %v211
        %v379 = vpop.f32.mrb[0].mxu0
        %v380 = vadd.f32 0.0, %v379
        %v381 = vpop.f32.mrb[0].mxu0
        %382 = vmatprep.mubr.f32.mxu0 %v214
        %383 = vmatmul.mubr.f32.gmra.mrb[0].mxu0 %v213
        %v384 = vpop.f32.mrb[0].mxu0
        %v385 = vadd.f32 0.0, %v384
        %v386 = vpop.f32.mrb[0].mxu0
        %387 = vmatprep.mubr.f32.mxu0 %v216
        %388 = vmatmul.mubr.f32.gmra.mrb[0].mxu0 %v215
        %v389 = vpop.f32.mrb[0].mxu0
        %v390 = vadd.f32 0.0, %v389
        %v391 = vpop.f32.mrb[0].mxu0
        %392 = vmatprep.mubr.f32.mxu0 %v218
        %393 = vmatmul.mubr.f32.gmra.mrb[0].mxu0 %v217
        %v394 = vpop.f32.mrb[0].mxu0
        %v395 = vadd.f32 0.0, %v394
        %v396 = vpop.f32.mrb[0].mxu0
        %397 = vmatprep.mubr.f32.mxu0 %v220
        %398 = vmatmul.mubr.f32.gmra.mrb[0].mxu0 %v219
        %v399 = vpop.f32.mrb[0].mxu0
        %v400 = vadd.f32 0.0, %v399
        %v401 = vpop.f32.mrb[0].mxu0
        %402 = vmatprep.mubr.f32.mxu0 %v222
        %403 = vmatmul.mubr.f32.gmra.mrb[0].mxu0 %v221
        %v404 = vpop.f32.mrb[0].mxu0
        %v405 = vadd.f32 0.0, %v404
        %v406 = vpop.f32.mrb[0].mxu0
        %407 = vmatprep.mubr.f32.mxu0 %v224
        %408 = vmatmul.mubr.f32.gmra.mrb[0].mxu0 %v223
        %v409 = vpop.f32.mrb[0].mxu0
        %v410 = vadd.f32 0.0, %v409
        %v411 = vpop.f32.mrb[0].mxu0
        %412 = vmatprep.mubr.f32.mxu0 %v226
        %413 = vmatmul.mubr.f32.gmra.mrb[0].mxu0 %v225
        %v414 = vpop.f32.mrb[0].mxu0
        %v415 = vadd.f32 0.0, %v414
        %v416 = vpop.f32.mrb[0].mxu0
        %417 = vmatprep.mubr.f32.mxu0 %v228
        %418 = vmatmul.mubr.f32.gmra.mrb[0].mxu0 %v227
        %v419 = vpop.f32.mrb[0].mxu0
        %v420 = vadd.f32 0.0, %v419
        %v421 = vpop.f32.mrb[0].mxu0
        %422 = vmatprep.mubr.f32.mxu0 %v230
        %423 = vmatmul.mubr.f32.gmra.mrb[0].mxu0 %v229
        %v424 = vpop.f32.mrb[0].mxu0
        %v425 = vadd.f32 0.0, %v424
        %v426 = vpop.f32.mrb[0].mxu0
        %427 = vmatprep.mubr.f32.mxu0 %v232
        %428 = vmatmul.mubr.f32.gmra.mrb[0].mxu0 %v231
        %v429 = vpop.f32.mrb[0].mxu0
        %v430 = vadd.f32 0.0, %v429
        %v431 = vpop.f32.mrb[0].mxu0
        %432 = vmatprep.mubr.f32.mxu0 %v234
        %433 = vmatmul.mubr.f32.gmra.mrb[0].mxu0 %v233
        %v434 = vpop.f32.mrb[0].mxu0
        %v435 = vadd.f32 0.0, %v434
        %v436 = vpop.f32.mrb[0].mxu0
        %437 = vmatprep.mubr.f32.mxu0 %v236
        %438 = vmatmul.mubr.f32.gmra.mrb[0].mxu0 %v235
        %v439 = vpop.f32.mrb[0].mxu0
        %v440 = vadd.f32 0.0, %v439
        %v441 = vpop.f32.mrb[0].mxu0
        %442 = vmatprep.mubr.f32.mxu0 %v238
        %443 = vmatmul.mubr.f32.gmra.mrb[0].mxu0 %v237
        %v444 = vpop.f32.mrb[0].mxu0
        %v445 = vadd.f32 0.0, %v444
        %v446 = vpop.f32.mrb[0].mxu0
        %447 = vmatprep.mubr.f32.mxu0 %v240
        %448 = vmatmul.mubr.f32.gmra.mrb[0].mxu0 %v239
        %v449 = vpop.f32.mrb[0].mxu0
        %v450 = vadd.f32 0.0, %v449
        %v451 = vpop.f32.mrb[0].mxu0
        %452 = vmatprep.mubr.f32.mxu0 %v242
        %453 = vmatmul.mubr.f32.gmra.mrb[0].mxu0 %v241
        %v454 = vpop.f32.mrb[0].mxu0
        %v455 = vadd.f32 0.0, %v454
        %v456 = vpop.f32.mrb[0].mxu0
        %457 = vmatprep.mubr.f32.mxu0 %v244
        %458 = vmatmul.mubr.f32.gmra.mrb[0].mxu0 %v243
        %v459 = vpop.f32.mrb[0].mxu0
        %v460 = vadd.f32 0.0, %v459
        %v461 = vpop.f32.mrb[0].mxu0
        %462 = vmatprep.mubr.f32.mxu0 %v246
        %463 = vmatmul.mubr.f32.gmra.mrb[0].mxu0 %v245
        %v464 = vpop.f32.mrb[0].mxu0
        %v465 = vadd.f32 0.0, %v464
        %v466 = vpop.f32.mrb[0].mxu0
        %467 = vmatprep.mubr.f32.mxu0 %v248
        %468 = vmatmul.mubr.f32.gmra.mrb[0].mxu0 %v247
        %v469 = vpop.f32.mrb[0].mxu0
        %v470 = vadd.f32 0.0, %v469
        %v471 = vpop.f32.mrb[0].mxu0
        %472 = vmatprep.mubr.f32.mxu0 %v250
        %473 = vmatmul.mubr.f32.gmra.mrb[0].mxu0 %v249
        %v474 = vpop.f32.mrb[0].mxu0
        %v475 = vadd.f32 0.0, %v474
        %v476 = vpop.f32.mrb[0].mxu0
        %477 = vmatprep.mubr.f32.mxu0 %v252
        %478 = vmatmul.mubr.f32.gmra.mrb[0].mxu0 %v251
        %v479 = vpop.f32.mrb[0].mxu0
        %v480 = vadd.f32 0.0, %v479
        %v481 = vpop.f32.mrb[0].mxu0
        %482 = vmatprep.mubr.f32.mxu0 %v254
        %483 = vmatmul.mubr.f32.gmra.mrb[0].mxu0 %v253
        %v484 = vpop.f32.mrb[0].mxu0
        %v485 = vadd.f32 0.0, %v484
        %v486 = vpop.f32.mrb[0].mxu0
        %487 = vmatprep.mubr.f32.mxu0 %v256
        %488 = vmatmul.mubr.f32.gmra.mrb[0].mxu0 %v255
        %v489 = vpop.f32.mrb[0].mxu0
        %v490 = vadd.f32 0.0, %v489
        %v491 = vpop.f32.mrb[0].mxu0
        %492 = vmatprep.mubr.f32.mxu0 %v258
        %493 = vmatmul.mubr.f32.gmra.mrb[0].mxu0 %v257
        %v494 = vpop.f32.mrb[0].mxu0
        %v495 = vadd.f32 0.0, %v494
        %v496 = vpop.f32.mrb[0].mxu0
        %497 = vmatprep.mubr.f32.mxu0 %v260
        %498 = vmatmul.mubr.f32.gmra.mrb[0].mxu0 %v259
        %v499 = vpop.f32.mrb[0].mxu0
        %v500 = vadd.f32 0.0, %v499
        %v501 = vpop.f32.mrb[0].mxu0
        %502 = vmatprep.mubr.f32.mxu0 %v262
        %503 = vmatmul.mubr.f32.gmra.mrb[0].mxu0 %v261
        %v504 = vpop.f32.mrb[0].mxu0
        %v505 = vadd.f32 0.0, %v504
        %v506 = vpop.f32.mrb[0].mxu0
        %507 = vmatprep.mubr.f32.mxu0 %v264
        %508 = vmatmul.mubr.f32.gmra.mrb[0].mxu0 %v263
        %v509 = vpop.f32.mrb[0].mxu0
        %v510 = vadd.f32 0.0, %v509
        %v511 = vpop.f32.mrb[0].mxu0
        %512 = vmatprep.mubr.f32.mxu0 %v266
        %513 = vmatmul.mubr.f32.gmra.mrb[0].mxu0 %v265
        %v514 = vpop.f32.mrb[0].mxu0
        %v515 = vadd.f32 0.0, %v514
        %v516 = vpop.f32.mrb[0].mxu0
        %517 = vmatprep.mubr.f32.mxu0 %v268
        %518 = vmatmul.mubr.f32.gmra.mrb[0].mxu0 %v267
        %v519 = vpop.f32.mrb[0].mxu0
        %v520 = vadd.f32 0.0, %v519
        %v521 = vpop.f32.mrb[0].mxu0
        %522 = vmatprep.mubr.f32.mxu0 %v270
        %523 = vmatmul.mubr.f32.gmra.mrb[0].mxu0 %v269
        %v524 = vpop.f32.mrb[0].mxu0
        %v525 = vadd.f32 0.0, %v524
        %v526 = vpop.f32.mrb[0].mxu0
        %527 = vdwg.mxu0
        %v528 = vld [vmem:[%s2] sm:$0x1]
        %v530 = vlaneseq
        %v531 = vshrl.u32 %v530, 7
        %v532 = vsub.s32 0, %v531
        %v533 = vrot.slane %v528, %v532
        %v535 = vadd.f32 %v370, %v533
        %v536 = vadd.f32 %v375, %v533
        %v537 = vadd.f32 %v380, %v533
        %v538 = vadd.f32 %v385, %v533
        %v539 = vadd.f32 %v390, %v533
        %v540 = vadd.f32 %v395, %v533
        %v541 = vadd.f32 %v400, %v533
        %v542 = vadd.f32 %v405, %v533
        %v543 = vadd.f32 %v410, %v533
        %v544 = vadd.f32 %v415, %v533
        %v545 = vadd.f32 %v420, %v533
        %v546 = vadd.f32 %v425, %v533
        %v547 = vadd.f32 %v430, %v533
        %v548 = vadd.f32 %v435, %v533
        %v549 = vadd.f32 %v440, %v533
        %v550 = vadd.f32 %v445, %v533
        %v551 = vadd.f32 %v450, %v533
        %v552 = vadd.f32 %v455, %v533
        %v553 = vadd.f32 %v460, %v533
        %v554 = vadd.f32 %v465, %v533
        %v555 = vadd.f32 %v470, %v533
        %v556 = vadd.f32 %v475, %v533
        %v557 = vadd.f32 %v480, %v533
        %v558 = vadd.f32 %v485, %v533
        %v559 = vadd.f32 %v490, %v533
        %v560 = vadd.f32 %v495, %v533
        %v561 = vadd.f32 %v500, %v533
        %v562 = vadd.f32 %v505, %v533
        %v563 = vadd.f32 %v510, %v533
        %v564 = vadd.f32 %v515, %v533
        %v565 = vadd.f32 %v520, %v533
        %v566 = vadd.f32 %v525, %v533
        %567 = vst [vmem:[%s204] sm:$0xff] %v535
        %568 = vst [vmem:[%s204 + $0x8] sm:$0xff] %v536
        %569 = vst [vmem:[%s204 + $0x10] sm:$0xff] %v537
        %570 = vst [vmem:[%s204 + $0x18] sm:$0xff] %v538
        %571 = vst [vmem:[%s204 + $0x20] sm:$0xff] %v539
        %572 = vst [vmem:[%s204 + $0x28] sm:$0xff] %v540
        %573 = vst [vmem:[%s204 + $0x30] sm:$0xff] %v541
        %574 = vst [vmem:[%s204 + $0x38] sm:$0xff] %v542
        %575 = vst [vmem:[%s204 + $0x40] sm:$0xff] %v543
        %576 = vst [vmem:[%s204 + $0x48] sm:$0xff] %v544
        %577 = vst [vmem:[%s204 + $0x50] sm:$0xff] %v545
        %578 = vst [vmem:[%s204 + $0x58] sm:$0xff] %v546
        %579 = vst [vmem:[%s204 + $0x60] sm:$0xff] %v547
        %580 = vst [vmem:[%s204 + $0x68] sm:$0xff] %v548
        %581 = vst [vmem:[%s204 + $0x70] sm:$0xff] %v549
        %582 = vst [vmem:[%s204 + $0x78] sm:$0xff] %v550
        %583 = vst [vmem:[%s204 + $0x80] sm:$0xff] %v551
        %584 = vst [vmem:[%s204 + $0x88] sm:$0xff] %v552
        %585 = vst [vmem:[%s204 + $0x90] sm:$0xff] %v553
        %586 = vst [vmem:[%s204 + $0x98] sm:$0xff] %v554
        %587 = vst [vmem:[%s204 + $0xa0] sm:$0xff] %v555
        %588 = vst [vmem:[%s204 + $0xa8] sm:$0xff] %v556
        %589 = vst [vmem:[%s204 + $0xb0] sm:$0xff] %v557
        %590 = vst [vmem:[%s204 + $0xb8] sm:$0xff] %v558
        %591 = vst [vmem:[%s204 + $0xc0] sm:$0xff] %v559
        %592 = vst [vmem:[%s204 + $0xc8] sm:$0xff] %v560
        %593 = vst [vmem:[%s204 + $0xd0] sm:$0xff] %v561
        %594 = vst [vmem:[%s204 + $0xd8] sm:$0xff] %v562
        %595 = vst [vmem:[%s204 + $0xe0] sm:$0xff] %v563
        %596 = vst [vmem:[%s204 + $0xe8] sm:$0xff] %v564
        %597 = vst [vmem:[%s204 + $0xf0] sm:$0xff] %v565
        %598 = vst [vmem:[%s204 + $0xf8] sm:$0xff] %v566
        %s599 = sand.u32 %s97, 1
        %s600 = scalar_lea.sflag [#allocation4], %s599
        %s601 = sand.u32 %s97, 1
        %s602 = smul.addr %s601, 256
        %s603 = scalar_lea.vmem [#allocation7], %s602
        // Predicated region
        $region41: #{tpu_custom_call.1} parent=31 // pred_check
          %p604 = pneg %p107
        $region42: #{tpu_custom_call.1} parent=31 // pred_check_branch
          %606 = sbr.rel (%p604) target = $region44
        $region43: #{tpu_custom_call.1} parent=31 // pred_region
          %s607 = smul.u32 16, %s21
          %s609 = ssub.s32 4096, 4096
          %610 = vsyncadd %s600, %s609
          %s611 = smul.addr %s607, 2
          %s612 = smul.addr %s611, 128
          %s613 = scalar_lea.hbm %s3, %s612
          %s614 = sshll.u32 %s603, 4
          %s615 = int_to_ptr.vmem [resolvable:$true] %s614
          %620 = dma.vmem_to_hbm [thread:$0]  %s615, 4096, %s613, %s600, 128, 128, 8
        $region44: #{tpu_custom_call.1} parent=31 // pred_fallthru
          _
      $region32: #{tpu_custom_call.1} parent=5 // pred_fallthru
        _
      %p621 = scmp.le.s32.totalorder 2, %s16
      // Predicated region
      $region45: #{tpu_custom_call.1} parent=5 // pred_check
        %p622 = pneg %p621
      $region46: #{tpu_custom_call.1} parent=5 // pred_check_branch
        %624 = sbr.rel (%p622) target = $region48
      $region47: #{tpu_custom_call.1} parent=5 // pred_region
        %s625 = ssub.s32 %s16, 2
        // Predicated region
        $region49: #{tpu_custom_call.1} parent=47 // pred_check
          %p626 = pneg %p113
        $region50: #{tpu_custom_call.1} parent=47 // pred_check_branch
          %628 = sbr.rel (%p626) target = $region52
        $region51: #{tpu_custom_call.1} parent=47 // pred_region
          %s629 = sand.u32 %s98, 1
          %s630 = scalar_lea.sflag [#allocation4], %s629
          %s631 = sand.u32 %s98, 1
          %s632 = smul.addr %s631, 256
          %s633 = scalar_lea.vmem [#allocation7], %s632
          %634 = dma.done %s630, 4096
        $region52: #{tpu_custom_call.1} parent=47 // pred_fallthru
          _
      $region48: #{tpu_custom_call.1} parent=5 // pred_fallthru
        _
    $region6: #{tpu_custom_call.1} parent=1 // loop_footer
      %s20 = sadd.s32 1, %s16
    $region7: #{tpu_custom_call.1} parent=1 // loop_footer_branch
      %15 = sbr.rel target = $region3
    $region8: #{tpu_custom_call.1} parent=1 // loop_exit
      _
    %635 = vsyncpa [#allocation3], 1
    %s636 = scalar_lea.sflag [#allocation3], 1
    %637 = vsyncpa %s636, 1
    %638 = vsyncpa [#allocation6], 1
    %639 = vsyncpa [#allocation4], 1
    %s640 = scalar_lea.sflag [#allocation4], 1
    %641 = vsyncpa %s640, 1

</llo_original>
